<compile_context>
chip_gen: v7x
topology: tpu7x:2x2x1
jax: 0.10.0
libtpu: 0.0.40
codegen_flags: <defaults>
</compile_context>

<pallas_src>
import functools
import numbers

import jax
import jax.numpy as jnp
from jax.experimental import pallas as pl
from jax.experimental.pallas import tpu as pltpu

_LANES = 128


# --------------------------------------------------------------------------
# Generation-aware tiling helpers
# --------------------------------------------------------------------------
def _tpu_vmem_capacity_bytes():
    """Physical VMEM per core; falls back to the smallest (v7x, 64 MiB)."""
    try:
        info = pltpu.get_tpu_info()
        cap = int(getattr(info, "vmem_capacity_bytes", 0))
        if cap > 0:
            return cap
    except Exception:
        pass
    return 64 << 20


def _pick_tiling(lead, lane, itemsize, n_streams, tile_lead_override=None):
    """Pick sublane-tile rows so `n_streams` double-buffered tiles stay inside
    a generation-aware VMEM budget.  Returns (tile_lead, grid, vmem_limit)."""
    cap = _tpu_vmem_capacity_bytes()
    # Live bytes across all double-buffered streams:
    #   v5e/v6e (128 MiB VMEM) -> 32 MiB;  v7x (64 MiB VMEM) -> 16 MiB.
    budget = min(32 << 20, cap // 4)
    per_buffer = max(budget // (2 * n_streams), 64 << 10)

    if tile_lead_override is not None:
        tile_lead = int(tile_lead_override)
    else:
        tile_lead = per_buffer // max(lane * itemsize, 1)

    if tile_lead >= lead:
        tile_lead = lead                      # single full-dim block
    else:
        tile_lead = max(8, (tile_lead // 8) * 8)
        tile_lead = min(tile_lead, lead)

    grid_size = pl.cdiv(lead, tile_lead)
    # Headroom over the live working set; v5e's 16 MiB scoped default would
    # otherwise cap the larger tiles.
    vmem_limit = int(min(cap * 3 // 4, budget + (16 << 20)))
    return tile_lead, grid_size, vmem_limit


def _collapse_2d(shape, total):
    """Copy-free 2-D (lead, lane) view of a contiguous array."""
    if total % _LANES == 0:
        return total // _LANES, _LANES        # lane-dense slab, free reshape
    if len(shape) >= 2:
        return total // shape[-1], shape[-1]  # free collapse of leading dims
    return 1, max(total, 1)


# --------------------------------------------------------------------------
# gmm_loss head: L1Loss (mean reduction) as a fused scalar-reduction kernel
# --------------------------------------------------------------------------
def _make_l1_mean_kernel(scale, lead, tile_lead, need_mask):
    def kernel(pred_ref, targ_ref, out_ref):
        i = pl.program_id(0)

        @pl.when(i == 0)
        def _init():
            out_ref[...] = jnp.zeros_like(out_ref)

        d = jnp.abs(pred_ref[...].astype(jnp.float32)
                    - targ_ref[...].astype(jnp.float32))
        if need_mask:
            rows = jax.lax.broadcasted_iota(jnp.int32, d.shape, 0) + i * tile_lead
            d = jnp.where(rows < lead, d, 0.0)
        out_ref[...] += jnp.sum(d, keepdims=True)

        @pl.when(i == pl.num_programs(0) - 1)
        def _finalize():
            out_ref[...] = out_ref[...] * scale

    return kernel


def gmm_l1_loss(pred, target, *, loss_weight=1.0, _tile_lead_override=None):
    """losses['gmm_loss'] = L1Loss(warped_cloth, parse_cloth):
       loss_weight * mean(|pred - target|)  (scalar, fused reduction)."""
    assert pred.shape == target.shape
    total = pred.size
    itemsize = jnp.dtype(pred.dtype).itemsize

    lead, lane = _collapse_2d(pred.shape, total)
    p2d = pred.reshape(lead, lane)
    t2d = target.reshape(lead, lane)

    tile_lead, grid_size, vmem_limit = _pick_tiling(
        lead, lane, itemsize, n_streams=2,
        tile_lead_override=_tile_lead_override)
    need_mask = (lead % tile_lead) != 0
    scale = float(loss_weight) / float(total)

    data_spec = pl.BlockSpec((tile_lead, lane), lambda i: (i, 0))
    out = pl.pallas_call(
        _make_l1_mean_kernel(scale, lead, tile_lead, need_mask),
        out_shape=jax.ShapeDtypeStruct((1, 1), jnp.float32),
        grid=(grid_size,),
        in_specs=[data_spec, data_spec],
        out_specs=pl.BlockSpec((1, 1), lambda i: (0, 0)),
        compiler_params=pltpu.CompilerParams(
            dimension_semantics=("arbitrary",),
            vmem_limit_bytes=vmem_limit),
        cost_estimate=pl.CostEstimate(
            flops=3 * total, transcendentals=0,
            bytes_accessed=2 * total * itemsize + 4),
    )(p2d, t2d)
    return out[0, 0]


# --------------------------------------------------------------------------
# L1NormLoss-style elementwise head (kept from the previous version)
# --------------------------------------------------------------------------
def _l1norm_kernel_static(x1_ref, x2_ref, x3_ref, o_ref, *, scale):
    s = x1_ref[...] + x2_ref[...] + x3_ref[...]          # input-dtype adds
    o_ref[...] = (s.astype(jnp.float32) * scale).astype(o_ref.dtype)


def _l1norm_kernel_smem(scale_ref, x1_ref, x2_ref, x3_ref, o_ref):
    s = x1_ref[...] + x2_ref[...] + x3_ref[...]
    o_ref[...] = (s.astype(jnp.float32) * scale_ref[0, 0]).astype(o_ref.dtype)


def l1_norm_loss(x1, x2, x3, length, *, loss_weight=0.0005, average=True,
                 _tile_lead_override=None):
    """loss_weight * ((x1 + x2 + x3) / 3) [/ length if average], elementwise."""
    assert x1.shape == x2.shape == x3.shape
    orig_shape = x1.shape
    total = x1.size
    dtype = x1.dtype
    itemsize = jnp.dtype(dtype).itemsize

    lead, lane = _collapse_2d(orig_shape, total)
    x1_2d = x1.reshape(lead, lane)
    x2_2d = x2.reshape(lead, lane)
    x3_2d = x3.reshape(lead, lane)

    # 3 inputs + 1 output, double buffered.
    tile_lead, grid_size, vmem_limit = _pick_tiling(
        lead, lane, itemsize, n_streams=4,
        tile_lead_override=_tile_lead_override)

    data_spec = pl.BlockSpec((tile_lead, lane), lambda i: (i, 0))
    common = dict(
        out_shape=jax.ShapeDtypeStruct((lead, lane), dtype),
        grid=(grid_size,),
        out_specs=pl.BlockSpec((tile_lead, lane), lambda i: (i, 0)),
        compiler_params=pltpu.CompilerParams(
            dimension_semantics=("parallel",),
            vmem_limit_bytes=vmem_limit),
        cost_estimate=pl.CostEstimate(
            flops=3 * total, transcendentals=0,
            bytes_accessed=4 * total * itemsize),
    )

    scale_is_static = (not average) or isinstance(length, numbers.Number)
    if scale_is_static:
        scale = float(loss_weight) / 3.0
        if average:
            scale = scale / float(length)
        out = pl.pallas_call(
            functools.partial(_l1norm_kernel_static, scale=scale),
            in_specs=[data_spec, data_spec, data_spec],
            **common,
        )(x1_2d, x2_2d, x3_2d)
    else:
        scale = jnp.asarray(loss_weight, jnp.float32) / jnp.float32(3.0)
        scale = scale / jnp.asarray(length, jnp.float32)
        out = pl.pallas_call(
            _l1norm_kernel_smem,
            in_specs=[pl.BlockSpec(memory_space=pltpu.SMEM),
                      data_spec, data_spec, data_spec],
            **common,
        )(scale.reshape(1, 1), x1_2d, x2_2d, x3_2d)

    return out.reshape(orig_shape)


# --------------------------------------------------------------------------
# Tests
# --------------------------------------------------------------------------
if __name__ == "__main__":
    key = jax.random.PRNGKey(0)
    k1, k2, k3 = jax.random.split(key, 3)

    loss_weight = 0.0005
    length = 8.0

    def ref_norm(a, b, c):
        return loss_weight * (((a + b + c) / 3.0) / length)

    def ref_l1(a, b, w=1.0):
        return w * jnp.mean(jnp.abs(a - b))

    # ---- elementwise L1NormLoss head -------------------------------------
    # T1: lane-divisible total (2*4*16*16 = 2048), static scale, single tile.
    shape = (2, 4, 16, 16)
    x1 = jax.random.normal(k1, shape, dtype=jnp.float32)
    x2 = jax.random.normal(k2, shape, dtype=jnp.float32)
    x3 = jax.random.normal(k3, shape, dtype=jnp.float32)
    out = jax.block_until_ready(
        l1_norm_loss(x1, x2, x3, length, loss_weight=loss_weight))
    assert out.shape == shape
    assert jnp.allclose(out, ref_norm(x1, x2, x3), atol=1e-6, rtol=1e-5), "T1"

    # T2: non-128-divisible total -> zero-copy (lead, last_dim) collapse.
    shape2 = (2, 3, 7, 5)
    y1 = jax.random.normal(k1, shape2, dtype=jnp.float32)
    y2 = jax.random.normal(k2, shape2, dtype=jnp.float32)
    y3 = jax.random.normal(k3, shape2, dtype=jnp.float32)
    out2 = jax.block_until_ready(
        l1_norm_loss(y1, y2, y3, length, loss_weight=loss_weight))
    assert out2.shape == shape2
    assert jnp.allclose(out2, ref_norm(y1, y2, y3), atol=1e-6, rtol=1e-5), "T2"

    # T3: multi-tile pipelined grid (tile override keeps it small & portable).
    shape3 = (2, 8, 128, 128)
    z1 = jax.random.normal(k1, shape3, dtype=jnp.float32)
    z2 = jax.random.normal(k2, shape3, dtype=jnp.float32)
    z3 = jax.random.normal(k3, shape3, dtype=jnp.float32)
    out3 = jax.block_until_ready(
        l1_norm_loss(z1, z2, z3, length, loss_weight=loss_weight,
                     _tile_lead_override=512))
    assert jnp.allclose(out3, ref_norm(z1, z2, z3), atol=1e-6, rtol=1e-5), "T3"

    # T4: traced length -> SMEM scalar path.
    out4 = jax.block_until_ready(
        l1_norm_loss(x1, x2, x3, jnp.asarray(length, jnp.float32),
                     loss_weight=loss_weight))
    assert jnp.allclose(out4, ref_norm(x1, x2, x3), atol=1e-6, rtol=1e-5), "T4"

    # T5: ragged final block (partial-block store path, no padding copies).
    shape5 = (2, 5, 16, 16)           # 2560 elems -> 20 rows of 128
    w1 = jax.random.normal(k1, shape5, dtype=jnp.float32)
    w2 = jax.random.normal(k2, shape5, dtype=jnp.float32)
    w3 = jax.random.normal(k3, shape5, dtype=jnp.float32)
    out5 = jax.block_until_ready(
        l1_norm_loss(w1, w2, w3, length, loss_weight=loss_weight,
                     _tile_lead_override=8))
    assert jnp.allclose(out5, ref_norm(w1, w2, w3), atol=1e-6, rtol=1e-5), "T5"

    # ---- gmm_loss head: L1Loss fused scalar reduction ---------------------
    # R1: small NCHW, single tile.
    r1 = jax.block_until_ready(gmm_l1_loss(x1, x2))
    assert jnp.allclose(r1, ref_l1(x1, x2), atol=1e-6, rtol=1e-5), "R1"

    # R2: ragged rows + multi-tile -> in-kernel row mask.
    r2 = jax.block_until_ready(gmm_l1_loss(y1, y2, _tile_lead_override=8))
    assert jnp.allclose(r2, ref_l1(y1, y2), atol=1e-6, rtol=1e-5), "R2"

    # R3: larger streaming reduction with loss_weight.
    r3 = jax.block_until_ready(gmm_l1_loss(z1, z2, loss_weight=loss_weight))
    assert jnp.allclose(r3, ref_l1(z1, z2, loss_weight),
                        atol=1e-8, rtol=1e-4), "R3"

    print("KERNEL_OK")
</pallas_src>

<mosaic_0001>
module attributes {stable_mosaic.version = 11 : i64} {
  func.func @_l1norm_kernel_static(%arg0: i32, %arg1: memref<16x128xf32, #tpu.memory_space<vmem>>, %arg2: memref<16x128xf32, #tpu.memory_space<vmem>>, %arg3: memref<16x128xf32, #tpu.memory_space<vmem>>, %arg4: memref<16x128xf32, #tpu.memory_space<vmem>>) attributes {dimension_semantics = [#tpu.dimension_semantics<parallel>], iteration_bounds = array<i64: 1>, scalar_prefetch = 0 : i64, scratch_operands = 0 : i64, tpu.core_type = #tpu.core_type<tc>, window_params = [{transform_indices = @transform_0, window_bounds = array<i64: 16, 128>}, {transform_indices = @transform_1, window_bounds = array<i64: 16, 128>}, {transform_indices = @transform_2, window_bounds = array<i64: 16, 128>}, {transform_indices = @transform_3, window_bounds = array<i64: 16, 128>}]} {
    %c0 = arith.constant 0 : index
    %c0_0 = arith.constant 0 : index
    %0 = vector.load %arg1[%c0, %c0_0] : memref<16x128xf32, #tpu.memory_space<vmem>>, vector<16x128xf32>
    %c0_1 = arith.constant 0 : index
    %c0_2 = arith.constant 0 : index
    %1 = vector.load %arg2[%c0_1, %c0_2] : memref<16x128xf32, #tpu.memory_space<vmem>>, vector<16x128xf32>
    %2 = arith.addf %0, %1 : vector<16x128xf32>
    %c0_3 = arith.constant 0 : index
    %c0_4 = arith.constant 0 : index
    %3 = vector.load %arg3[%c0_3, %c0_4] : memref<16x128xf32, #tpu.memory_space<vmem>>, vector<16x128xf32>
    %4 = arith.addf %2, %3 : vector<16x128xf32>
    %cst = arith.constant 2.08333331E-5 : f32
    %5 = vector.broadcast %cst : f32 to vector<16x128xf32>
    %6 = arith.mulf %4, %5 : vector<16x128xf32>
    %c0_5 = arith.constant 0 : index
    %c0_6 = arith.constant 0 : index
    %7 = vector.load %arg4[%c0_5, %c0_6] : memref<16x128xf32, #tpu.memory_space<vmem>>, vector<16x128xf32>
    tpu.vector_store %arg4[%c0_5, %c0_6], %6 {strides = array<i32>} : memref<16x128xf32, #tpu.memory_space<vmem>>, vector<16x128xf32>,
    return
  }
  func.func @transform_0(%arg0: i32) -> (i32, i32) {
    %c0_i32 = arith.constant 0 : i32
    %c0_i32_0 = arith.constant 0 : i32
    return %arg0, %c0_i32 : i32, i32
  }
  func.func @transform_1(%arg0: i32) -> (i32, i32) {
    %c0_i32 = arith.constant 0 : i32
    %c0_i32_0 = arith.constant 0 : i32
    return %arg0, %c0_i32 : i32, i32
  }
  func.func @transform_2(%arg0: i32) -> (i32, i32) {
    %c0_i32 = arith.constant 0 : i32
    %c0_i32_0 = arith.constant 0 : i32
    return %arg0, %c0_i32 : i32, i32
  }
  func.func @transform_3(%arg0: i32) -> (i32, i32) {
    %c0_i32 = arith.constant 0 : i32
    %c0_i32_0 = arith.constant 0 : i32
    return %arg0, %c0_i32 : i32, i32
  }
}

</mosaic_0001>

<llo_original>
// kernel: tpu_custom_call.1
$region0: #{tpu_custom_call.1}
  #allocation0 [shape = 'u32[]', space=smem, size = 0x4, offset = 0x4, fixed_abs, tag = 'smem constant byte address 0x4 - core index']
  #allocation1 [shape = 'u32[144,128]{1,0:T(1,128)}', space=vmem, size = 0x12000, scoped, tag = 'internal scratch']
  %s0 = inlined_call_operand.hbm [shape: f32[16,128], index: 0, kind: input, shape index: {}]
  %s1 = inlined_call_operand.hbm [shape: f32[16,128], index: 1, kind: input, shape index: {}]
  %s2 = inlined_call_operand.hbm [shape: f32[16,128], index: 2, kind: input, shape index: {}]
  %s3 = inlined_call_operand.hbm [shape: f32[16,128], index: 3, kind: output, shape index: {}]
  %s4 = sld [smem:[#allocation0]]
  $region34: #{tpu_custom_call.1} parent=0
    _
  %s6 = ssub.s32 1, %s4
  %s7 = scalar_select 0, %s6, %s4
  $region1: #{tpu_custom_call.1} parent=0
    #allocation2 [shape = 'u8[8192]{0}', space=vmem, size = 0x2000, scoped, tag = 'input window, operand 0, single buffered']
    #allocation3 [shape = 's32[1]{0}', space=sflag, size = 0x4, scoped, tag = 'scoped memory for tpu_custom_call.1']
    #allocation4 [shape = 's32[1]{0}', space=sflag, size = 0x4, scoped, tag = 'scoped memory for tpu_custom_call.1']
    #allocation5 [shape = 'u8[8192]{0}', space=vmem, size = 0x2000, scoped, tag = 'input window, operand 1, single buffered']
    #allocation6 [shape = 's32[1]{0}', space=sflag, size = 0x4, scoped, tag = 'scoped memory for tpu_custom_call.1']
    #allocation7 [shape = 'u8[8192]{0}', space=vmem, size = 0x2000, scoped, tag = 'input window, operand 2, single buffered']
    #allocation8 [shape = 'u8[8192]{0}', space=vmem, size = 0x2000, scoped, tag = 'output window, operand 0, single buffered']
    %8 = vsyncpa [#allocation3], 0
    %9 = vsyncpa [#allocation6], 0
    %10 = vsyncpa [#allocation4], 0
    // Predicated region
    $region2: #{tpu_custom_call.1} parent=1 // pred_check
      _
    $region3: #{tpu_custom_call.1} parent=1 // pred_check_branch
      %12 = sbr.rel (0) target = $region5
    $region4: #{tpu_custom_call.1} parent=1 // pred_region
      %s14 = ssub.s32 256, 256
      %15 = vsyncadd [#allocation3], %s14
      %s16 = sshll.u32 [#allocation2], 4
      %s17 = int_to_ptr.vmem [resolvable:$true] %s16
      %22 = dma.hbm_to_vmem [thread:$0]  %s0, 256, %s17, [#allocation3], 128, 128, 8
    $region5: #{tpu_custom_call.1} parent=1 // pred_fallthru
      _
    // Predicated region
    $region6: #{tpu_custom_call.1} parent=1 // pred_check
      _
    $region7: #{tpu_custom_call.1} parent=1 // pred_check_branch
      %24 = sbr.rel (0) target = $region9
    $region8: #{tpu_custom_call.1} parent=1 // pred_region
      %s26 = ssub.s32 256, 256
      %27 = vsyncadd [#allocation6], %s26
      %s28 = sshll.u32 [#allocation5], 4
      %s29 = int_to_ptr.vmem [resolvable:$true] %s28
      %34 = dma.hbm_to_vmem [thread:$0]  %s1, 256, %s29, [#allocation6], 128, 128, 8
    $region9: #{tpu_custom_call.1} parent=1 // pred_fallthru
      _
    // Predicated region
    $region10: #{tpu_custom_call.1} parent=1 // pred_check
      _
    $region11: #{tpu_custom_call.1} parent=1 // pred_check_branch
      %36 = sbr.rel (0) target = $region13
    $region12: #{tpu_custom_call.1} parent=1 // pred_region
      %s38 = ssub.s32 256, 256
      %39 = vsyncadd [#allocation6], %s38
      %s40 = sshll.u32 [#allocation7], 4
      %s41 = int_to_ptr.vmem [resolvable:$true] %s40
      %46 = dma.hbm_to_vmem [thread:$0]  %s2, 256, %s41, [#allocation6], 128, 128, 8
    $region13: #{tpu_custom_call.1} parent=1 // pred_fallthru
      _
    // Predicated region
    $region14: #{tpu_custom_call.1} parent=1 // pred_check
      _
    $region15: #{tpu_custom_call.1} parent=1 // pred_check_branch
      %48 = sbr.rel (0) target = $region17
    $region16: #{tpu_custom_call.1} parent=1 // pred_region
      %49 = dma.done [#allocation3], 256
    $region17: #{tpu_custom_call.1} parent=1 // pred_fallthru
      _
    // Predicated region
    $region18: #{tpu_custom_call.1} parent=1 // pred_check
      _
    $region19: #{tpu_custom_call.1} parent=1 // pred_check_branch
      %51 = sbr.rel (0) target = $region21
    $region20: #{tpu_custom_call.1} parent=1 // pred_region
      %52 = dma.done [#allocation6], 256
    $region21: #{tpu_custom_call.1} parent=1 // pred_fallthru
      _
    // Predicated region
    $region22: #{tpu_custom_call.1} parent=1 // pred_check
      _
    $region23: #{tpu_custom_call.1} parent=1 // pred_check_branch
      %54 = sbr.rel (0) target = $region25
    $region24: #{tpu_custom_call.1} parent=1 // pred_region
      %55 = dma.done [#allocation6], 256
    $region25: #{tpu_custom_call.1} parent=1 // pred_fallthru
      _
    %v56 = vld [vmem:[#allocation2] sm:$0xff]
    %v57 = vld [vmem:[#allocation2 + $0x8] sm:$0xff]
    %v58 = vld [vmem:[#allocation5] sm:$0xff]
    %v59 = vld [vmem:[#allocation5 + $0x8] sm:$0xff]
    %v60 = vadd.f32 %v56, %v58
    %v61 = vadd.f32 %v57, %v59
    %v62 = vld [vmem:[#allocation7] sm:$0xff]
    %v63 = vld [vmem:[#allocation7 + $0x8] sm:$0xff]
    %v64 = vadd.f32 %v60, %v62
    %v65 = vadd.f32 %v61, %v63
    %v66 = vmul.f32 %v64, 2.0833333e-05
    %v67 = vmul.f32 %v65, 2.0833333e-05
    %68 = vst [vmem:[#allocation8] sm:$0xff] %v66
    %69 = vst [vmem:[#allocation8 + $0x8] sm:$0xff] %v67
    // Predicated region
    $region26: #{tpu_custom_call.1} parent=1 // pred_check
      _
    $region27: #{tpu_custom_call.1} parent=1 // pred_check_branch
      %71 = sbr.rel (0) target = $region29
    $region28: #{tpu_custom_call.1} parent=1 // pred_region
      %s73 = ssub.s32 256, 256
      %74 = vsyncadd [#allocation4], %s73
      %s75 = sshll.u32 [#allocation8], 4
      %s76 = int_to_ptr.vmem [resolvable:$true] %s75
      %81 = dma.vmem_to_hbm [thread:$0]  %s76, 256, %s3, [#allocation4], 128, 128, 8
    $region29: #{tpu_custom_call.1} parent=1 // pred_fallthru
      _
    // Predicated region
    $region30: #{tpu_custom_call.1} parent=1 // pred_check
      _
    $region31: #{tpu_custom_call.1} parent=1 // pred_check_branch
      %83 = sbr.rel (0) target = $region33
    $region32: #{tpu_custom_call.1} parent=1 // pred_region
      %84 = dma.done [#allocation4], 256
    $region33: #{tpu_custom_call.1} parent=1 // pred_fallthru
      _
    %85 = vsyncpa [#allocation3], 1
    %86 = vsyncpa [#allocation6], 1
    %87 = vsyncpa [#allocation4], 1

</llo_original>
